<compile_context>
chip_gen: v7x
topology: tpu7x:2x2x1
jax: 0.10.0
libtpu: 0.0.40
codegen_flags: <defaults>
</compile_context>

<pallas_src>
import functools

import jax
import jax.numpy as jnp
from jax.experimental import pallas as pl
from jax.experimental.pallas import tpu as pltpu


def _round_up(x, m):
    return (x + m - 1) // m * m


def _autorec_kernel(K, x_ref, we_ref, be_ref, wd_ref, bd_ref, o_ref,
                    acc_ref, h_ref):
    # x_ref:  (tb, tm)   bf16 input-ratings chunk (input columns k*tm:(k+1)*tm)
    # we_ref: (tm, Hp)   bf16 encoder-weight chunk (pre-transposed)
    # be_ref: (1, Hp)    f32 encoder bias
    # wd_ref: (Hp, tm)   bf16 decoder-weight chunk (pre-chunked, contiguous in HBM)
    # bd_ref: (1, tm)    f32 decoder bias chunk
    # o_ref:  (tb, tm)   reconstructed ratings chunk
    # acc_ref: (tb, Hp)  f32 encoder accumulator (scratch)
    # h_ref:  (tb, Hp)   bf16 sigmoid activation (scratch)
    j = pl.program_id(1)

    # ---- Phase 1 (j < K): encoder contraction, tiled over the input dim ----
    @pl.when(j == 0)
    def _():
        acc_ref[...] = jnp.zeros_like(acc_ref)

    @pl.when(j < K)
    def _():
        acc_ref[...] += jnp.dot(x_ref[...], we_ref[...],
                                preferred_element_type=jnp.float32)

    @pl.when(j == K - 1)
    def _():
        # Bias + sigmoid once per batch tile; stored in bf16 so the decoder
        # sweep never reloads/casts an f32 activation.
        h_ref[...] = jax.nn.sigmoid(acc_ref[...] + be_ref[...]).astype(h_ref.dtype)

    # ---- Phase 2 (j >= K): lane-dense decoder output chunks ----
    @pl.when(j >= K)
    def _():
        y = jnp.dot(h_ref[...], wd_ref[...], preferred_element_type=jnp.float32)
        o_ref[...] = (y + bd_ref[...]).astype(o_ref.dtype)


@functools.partial(jax.jit, static_argnames=("block_b", "block_m", "weight_dtype"))
def autorec_forward(x, w_enc, b_enc, w_dec, b_dec, *,
                    block_b=512, block_m=1024, weight_dtype=jnp.bfloat16):
    """x: (B, M); w_enc: (H, M); b_enc: (H,); w_dec: (M, H); b_dec: (M,)."""
    B, M = x.shape
    H = w_enc.shape[0]

    # ---- Padded, TPU-friendly shapes -------------------------------------
    Hp = _round_up(H, 128)                                   # 500 -> 512 lanes
    tm = _round_up(min(block_m, _round_up(M, 128)), 128)     # lane-dense chunk
    Mp = _round_up(M, tm)
    K = Mp // tm                       # encoder-contraction chunks == decoder chunks
    tb = _round_up(min(block_b, _round_up(B, 8)), 8)
    Bp = _round_up(B, tb)
    # v7x megacore: prefer >= 2 batch tiles so the "parallel" axis can shard across
    # both TensorCores -- but only when each half stays above the MXU-bound crossover
    # (~600 rows); otherwise we would just double decoder-weight streaming on
    # single-core chips.
    if Bp // tb < 2 and tb >= 1024:
        tb = _round_up(tb // 2, 8)
        Bp = _round_up(B, tb)

    w_itemsize = jnp.dtype(weight_dtype).itemsize
    out_dtype = x.dtype
    out_itemsize = jnp.dtype(out_dtype).itemsize

    # ---- Host-side prep: pad, transpose, cast to bf16 ---------------------
    xp = jnp.pad(x, ((0, Bp - B), (0, Mp - M))).astype(weight_dtype)          # (Bp, Mp)
    # nn.Linear stores (out_features, in_features); pre-transpose so the kernel
    # does plain row-major matmuls.  Zero-padding keeps the padded hidden lanes
    # harmless: sigmoid(0)=0.5 there, but the matching decoder rows are zero.
    we_t = jnp.pad(w_enc, ((0, Hp - H), (0, Mp - M))).T.astype(weight_dtype)  # (Mp, Hp)
    wd_p = jnp.pad(w_dec, ((0, Mp - M), (0, Hp - H))).astype(weight_dtype)    # (Mp, Hp)
    # Pre-chunk the decoder weight so each streamed (Hp, tm) chunk is contiguous.
    wd_chunks = wd_p.reshape(K, tm, Hp).transpose(0, 2, 1)                    # (K, Hp, tm)
    be = jnp.pad(b_enc, (0, Hp - H)).astype(jnp.float32).reshape(1, Hp)
    bd = jnp.pad(b_dec, (0, Mp - M)).astype(jnp.float32).reshape(1, Mp)

    n_batch_tiles = Bp // tb
    grid = (n_batch_tiles, 2 * K)

    # Advisory cost estimate for XLA scheduling around the custom call.
    flops = 4 * Bp * Mp * Hp                                 # two matmuls
    bytes_accessed = (xp.size * w_itemsize
                      + n_batch_tiles * (we_t.size + wd_chunks.size) * w_itemsize
                      + (Hp + Mp) * 4
                      + Bp * Mp * out_itemsize)

    # VMEM plan: every block double-buffered + the two activation scratches.
    vmem_bytes = 2 * (tb * tm * w_itemsize        # x chunk
                      + tm * Hp * w_itemsize      # encoder-weight chunk
                      + Hp * tm * w_itemsize      # decoder-weight chunk
                      + tb * tm * out_itemsize    # output chunk
                      + (Hp + tm) * 4)            # biases
    vmem_bytes += tb * Hp * (4 + w_itemsize)      # f32 accumulator + bf16 activation
    compiler_kwargs = dict(dimension_semantics=("parallel", "arbitrary"))
    if vmem_bytes > 12 * 1024 * 1024:
        try:
            vmem_cap = pltpu.get_tpu_info().vmem_capacity_bytes
        except Exception:
            vmem_cap = 64 * 1024 * 1024           # smallest across v5e/v6e/v7x
        compiler_kwargs["vmem_limit_bytes"] = int(
            min(max(1.5 * vmem_bytes, 32 * 1024 * 1024), 0.85 * vmem_cap))

    kmin = K - 1  # clamp for the encoder-phase index maps

    out_padded = pl.pallas_call(
        functools.partial(_autorec_kernel, K),
        out_shape=jax.ShapeDtypeStruct((Bp, Mp), out_dtype),
        grid_spec=pltpu.PrefetchScalarGridSpec(
            num_scalar_prefetch=0,
            grid=grid,
            in_specs=[
                # x chunk: advances during the encoder phase, then parks
                # (no re-DMA during the decoder sweep).
                pl.BlockSpec((tb, tm), lambda i, j: (i, jnp.minimum(j, kmin))),
                # encoder-weight chunk: same clamping.
                pl.BlockSpec((tm, Hp), lambda i, j: (jnp.minimum(j, kmin), 0)),
                # encoder bias: grid-invariant (tiny).
                pl.BlockSpec((1, Hp), lambda i, j: (0, 0)),
                # decoder-weight chunk: parked at chunk 0 during the encoder
                # phase, advances during the decoder phase.
                pl.BlockSpec((None, Hp, tm),
                             lambda i, j: (jnp.maximum(j - K, 0), 0, 0)),
                # decoder bias chunk.
                pl.BlockSpec((1, tm), lambda i, j: (0, jnp.maximum(j - K, 0))),
            ],
            out_specs=pl.BlockSpec((tb, tm),
                                   lambda i, j: (i, jnp.maximum(j - K, 0))),
            scratch_shapes=[pltpu.VMEM((tb, Hp), jnp.float32),   # encoder accumulator
                            pltpu.VMEM((tb, Hp), weight_dtype)], # sigmoid activation
        ),
        compiler_params=pltpu.CompilerParams(**compiler_kwargs),
        cost_estimate=pl.CostEstimate(
            flops=flops, transcendentals=Bp * Hp, bytes_accessed=bytes_accessed),
    )(xp, we_t, be, wd_chunks, bd)

    return out_padded[:B, :M]


def _xavier_uniform(key, shape, dtype=jnp.float32):
    # Matches torch.nn.init.xavier_uniform_ for a Linear weight (out, in).
    fan_out, fan_in = shape
    limit = jnp.sqrt(6.0 / (fan_in + fan_out))
    return jax.random.uniform(key, shape, dtype, minval=-limit, maxval=limit)


def init_autoencoder_params(key, num_users, num_movies, hidden_dim=500,
                            is_user_based=True, dtype=jnp.float32):
    in_dim = num_movies if is_user_based else num_users
    k1, k2, k3, k4 = jax.random.split(key, 4)
    # nn.Linear stores weight as (out_features, in_features).
    w_enc = _xavier_uniform(k1, (hidden_dim, in_dim), dtype)
    w_dec = _xavier_uniform(k2, (in_dim, hidden_dim), dtype)
    # nn.Linear default bias init: U(-1/sqrt(fan_in), 1/sqrt(fan_in)).
    be_bound = 1.0 / jnp.sqrt(jnp.asarray(in_dim, dtype))
    bd_bound = 1.0 / jnp.sqrt(jnp.asarray(hidden_dim, dtype))
    b_enc = jax.random.uniform(k3, (hidden_dim,), dtype, -be_bound, be_bound)
    b_dec = jax.random.uniform(k4, (in_dim,), dtype, -bd_bound, bd_bound)
    return w_enc, b_enc, w_dec, b_dec


if __name__ == "__main__":
    key = jax.random.PRNGKey(0)

    # Small, module-consistent shapes: user-based AutoRec -> input dim = num_movies.
    num_users = 8          # batch of user rating vectors
    num_movies = 256       # input / output dimension
    hidden_dim = 500       # matches the module's fixed hidden_dim

    pkey, xkey = jax.random.split(key)
    w_enc, b_enc, w_dec, b_dec = init_autoencoder_params(
        pkey, num_users, num_movies, hidden_dim=hidden_dim, is_user_based=True)

    x = jax.random.uniform(xkey, (num_users, num_movies), jnp.float32,
                           minval=0.0, maxval=5.0)  # synthetic ratings

    y = autorec_forward(x, w_enc, b_enc, w_dec, b_dec)
    y = jax.block_until_ready(y)

    # Reference in plain JAX with the same bf16 weight/activation rounding the
    # kernel uses (f32 accumulation), so tolerances stay tight.  Note this is a
    # deliberate bf16 precision choice relative to an all-f32 PyTorch module.
    we = w_enc.astype(jnp.bfloat16).astype(jnp.float32)
    wd = w_dec.astype(jnp.bfloat16).astype(jnp.float32)
    xb = x.astype(jnp.bfloat16).astype(jnp.float32)
    h_ref = jax.nn.sigmoid(xb @ we.T + b_enc)
    y_ref = h_ref.astype(jnp.bfloat16).astype(jnp.float32) @ wd.T + b_dec

    assert y.shape == (num_users, num_movies)
    assert jnp.allclose(y, y_ref, atol=2e-2, rtol=2e-2), float(
        jnp.max(jnp.abs(y - y_ref)))

    print("KERNEL_OK")
</pallas_src>

<mosaic_0001>
module attributes {stable_mosaic.version = 11 : i64} {
  func.func @_autorec_kernel(%arg0: i32, %arg1: i32, %arg2: memref<8x256xbf16, #tpu.memory_space<vmem>>, %arg3: memref<256x512xbf16, #tpu.memory_space<vmem>>, %arg4: memref<1x512xf32, #tpu.memory_space<vmem>>, %arg5: memref<1x512x256xbf16, #tpu.memory_space<vmem>>, %arg6: memref<1x256xf32, #tpu.memory_space<vmem>>, %arg7: memref<8x256xf32, #tpu.memory_space<vmem>>, %arg8: memref<8x512xf32, #tpu.memory_space<vmem>>, %arg9: memref<8x512xbf16, #tpu.memory_space<vmem>>) attributes {dimension_semantics = [#tpu.dimension_semantics<parallel>, #tpu.dimension_semantics<arbitrary>], iteration_bounds = array<i64: 1, 2>, scalar_prefetch = 0 : i64, scratch_operands = 2 : i64, tpu.core_type = #tpu.core_type<tc>, window_params = [{transform_indices = @transform_0, window_bounds = array<i64: 8, 256>}, {transform_indices = @transform_1, window_bounds = array<i64: 256, 512>}, {pipeline_mode = #tpu.pipeline_mode<synchronous>, transform_indices = @transform_2, window_bounds = array<i64: 1, 512>}, {transform_indices = @transform_3, window_bounds = array<i64: 1, 512, 256>}, {transform_indices = @transform_4, window_bounds = array<i64: 1, 256>}, {transform_indices = @transform_5, window_bounds = array<i64: 8, 256>}]} {
    %c0_i32 = arith.constant 0 : i32
    %0 = arith.cmpi eq, %arg1, %c0_i32 : i32
    %1 = arith.extui %0 : i1 to i32
    %c0_i32_0 = arith.constant 0 : i32
    %2 = arith.cmpi ne, %1, %c0_i32_0 : i32
    scf.if %2 {
      %cst = arith.constant 0.000000e+00 : f32
      %12 = vector.broadcast %cst : f32 to vector<8x512xf32>
      %c0 = arith.constant 0 : index
      %c0_6 = arith.constant 0 : index
      %13 = vector.load %arg8[%c0, %c0_6] : memref<8x512xf32, #tpu.memory_space<vmem>>, vector<8x512xf32>
      tpu.vector_store %arg8[%c0, %c0_6], %12 {strides = array<i32>} : memref<8x512xf32, #tpu.memory_space<vmem>>, vector<8x512xf32>,
    } else {
    }
    %c1_i32 = arith.constant 1 : i32
    %3 = arith.cmpi slt, %arg1, %c1_i32 : i32
    %4 = arith.extui %3 : i1 to i32
    %c0_i32_1 = arith.constant 0 : i32
    %5 = arith.cmpi ne, %4, %c0_i32_1 : i32
    scf.if %5 {
      %c0 = arith.constant 0 : index
      %c0_6 = arith.constant 0 : index
      %12 = vector.load %arg8[%c0, %c0_6] : memref<8x512xf32, #tpu.memory_space<vmem>>, vector<8x512xf32>
      %c0_7 = arith.constant 0 : index
      %c0_8 = arith.constant 0 : index
      %13 = vector.load %arg2[%c0_7, %c0_8] : memref<8x256xbf16, #tpu.memory_space<vmem>>, vector<8x256xbf16>
      %c0_9 = arith.constant 0 : index
      %c0_10 = arith.constant 0 : index
      %14 = vector.load %arg3[%c0_9, %c0_10] : memref<256x512xbf16, #tpu.memory_space<vmem>>, vector<256x512xbf16>
      %cst = arith.constant dense<0.000000e+00> : vector<8x512xf32>
      %15 = tpu.matmul %13, %14, %cst {dimension_numbers = #tpu.dot_dimension_numbers<[1], [0], [0], [1], [0, 0, 1, 1], [], []>} : vector<8x256xbf16>, vector<256x512xbf16>, vector<8x512xf32> -> vector<8x512xf32>
      %16 = arith.addf %12, %15 : vector<8x512xf32>
      %c0_11 = arith.constant 0 : index
      %c0_12 = arith.constant 0 : index
      %17 = vector.load %arg8[%c0_11, %c0_12] : memref<8x512xf32, #tpu.memory_space<vmem>>, vector<8x512xf32>
      tpu.vector_store %arg8[%c0_11, %c0_12], %16 {strides = array<i32>} : memref<8x512xf32, #tpu.memory_space<vmem>>, vector<8x512xf32>,
    } else {
    }
    %c0_i32_2 = arith.constant 0 : i32
    %6 = arith.cmpi eq, %arg1, %c0_i32_2 : i32
    %7 = arith.extui %6 : i1 to i32
    %c0_i32_3 = arith.constant 0 : i32
    %8 = arith.cmpi ne, %7, %c0_i32_3 : i32
    scf.if %8 {
      %c0 = arith.constant 0 : index
      %c0_6 = arith.constant 0 : index
      %12 = vector.load %arg8[%c0, %c0_6] : memref<8x512xf32, #tpu.memory_space<vmem>>, vector<8x512xf32>
      %c0_7 = arith.constant 0 : index
      %c0_8 = arith.constant 0 : index
      %13 = vector.load %arg4[%c0_7, %c0_8] : memref<1x512xf32, #tpu.memory_space<vmem>>, vector<1x512xf32>
      %14 = vector.broadcast %13 : vector<1x512xf32> to vector<8x512xf32>
      %15 = arith.addf %12, %14 : vector<8x512xf32>
      %16 = arith.negf %15 : vector<8x512xf32>
      %17 = math.exp %16 : vector<8x512xf32>
      %cst = arith.constant 1.000000e+00 : f32
      %18 = vector.broadcast %cst : f32 to vector<8x512xf32>
      %19 = arith.addf %18, %17 : vector<8x512xf32>
      %20 = arith.divf %18, %19 : vector<8x512xf32>
      %21 = arith.truncf %20 : vector<8x512xf32> to vector<8x512xbf16>
      %c0_9 = arith.constant 0 : index
      %c0_10 = arith.constant 0 : index
      %22 = vector.load %arg9[%c0_9, %c0_10] : memref<8x512xbf16, #tpu.memory_space<vmem>>, vector<8x512xbf16>
      tpu.vector_store %arg9[%c0_9, %c0_10], %21 {strides = array<i32>} : memref<8x512xbf16, #tpu.memory_space<vmem>>, vector<8x512xbf16>,
    } else {
    }
    %c1_i32_4 = arith.constant 1 : i32
    %9 = arith.cmpi sge, %arg1, %c1_i32_4 : i32
    %10 = arith.extui %9 : i1 to i32
    %c0_i32_5 = arith.constant 0 : i32
    %11 = arith.cmpi ne, %10, %c0_i32_5 : i32
    scf.if %11 {
      %c0 = arith.constant 0 : index
      %c0_6 = arith.constant 0 : index
      %12 = vector.load %arg9[%c0, %c0_6] : memref<8x512xbf16, #tpu.memory_space<vmem>>, vector<8x512xbf16>
      %c0_7 = arith.constant 0 : index
      %c0_8 = arith.constant 0 : index
      %c0_9 = arith.constant 0 : index
      %13 = vector.load %arg5[%c0_7, %c0_8, %c0_9] : memref<1x512x256xbf16, #tpu.memory_space<vmem>>, vector<1x512x256xbf16>
      %14 = vector.shape_cast %13 : vector<1x512x256xbf16> to vector<512x256xbf16>
      %cst = arith.constant dense<0.000000e+00> : vector<8x256xf32>
      %15 = tpu.matmul %12, %14, %cst {dimension_numbers = #tpu.dot_dimension_numbers<[1], [0], [0], [1], [0, 0, 1, 1], [], []>} : vector<8x512xbf16>, vector<512x256xbf16>, vector<8x256xf32> -> vector<8x256xf32>
      %c0_10 = arith.constant 0 : index
      %c0_11 = arith.constant 0 : index
      %16 = vector.load %arg6[%c0_10, %c0_11] : memref<1x256xf32, #tpu.memory_space<vmem>>, vector<1x256xf32>
      %17 = vector.broadcast %16 : vector<1x256xf32> to vector<8x256xf32>
      %18 = arith.addf %15, %17 : vector<8x256xf32>
      %c0_12 = arith.constant 0 : index
      %c0_13 = arith.constant 0 : index
      %19 = vector.load %arg7[%c0_12, %c0_13] : memref<8x256xf32, #tpu.memory_space<vmem>>, vector<8x256xf32>
      tpu.vector_store %arg7[%c0_12, %c0_13], %18 {strides = array<i32>} : memref<8x256xf32, #tpu.memory_space<vmem>>, vector<8x256xf32>,
    } else {
    }
    return
  }
  func.func @transform_0(%arg0: i32, %arg1: i32) -> (i32, i32) {
    %c0_i32 = arith.constant 0 : i32
    %0 = arith.minsi %arg1, %c0_i32 : i32
    %c0_i32_0 = arith.constant 0 : i32
    return %arg0, %0 : i32, i32
  }
  func.func @transform_1(%arg0: i32, %arg1: i32) -> (i32, i32) {
    %c0_i32 = arith.constant 0 : i32
    %0 = arith.minsi %arg1, %c0_i32 : i32
    %c0_i32_0 = arith.constant 0 : i32
    %c0_i32_1 = arith.constant 0 : i32
    return %0, %c0_i32_0 : i32, i32
  }
  func.func @transform_2(%arg0: i32, %arg1: i32) -> (i32, i32) {
    %c0_i32 = arith.constant 0 : i32
    %c0_i32_0 = arith.constant 0 : i32
    %c0_i32_1 = arith.constant 0 : i32
    return %c0_i32, %c0_i32_0 : i32, i32
  }
  func.func @transform_3(%arg0: i32, %arg1: i32) -> (i32, i32, i32) {
    %c1_i32 = arith.constant 1 : i32
    %0 = arith.subi %arg1, %c1_i32 : i32
    %c0_i32 = arith.constant 0 : i32
    %1 = arith.maxsi %0, %c0_i32 : i32
    %c0_i32_0 = arith.constant 0 : i32
    %c0_i32_1 = arith.constant 0 : i32
    %c0_i32_2 = arith.constant 0 : i32
    return %1, %c0_i32_0, %c0_i32_1 : i32, i32, i32
  }
  func.func @transform_4(%arg0: i32, %arg1: i32) -> (i32, i32) {
    %c1_i32 = arith.constant 1 : i32
    %0 = arith.subi %arg1, %c1_i32 : i32
    %c0_i32 = arith.constant 0 : i32
    %1 = arith.maxsi %0, %c0_i32 : i32
    %c0_i32_0 = arith.constant 0 : i32
    %c0_i32_1 = arith.constant 0 : i32
    return %c0_i32_0, %1 : i32, i32
  }
  func.func @transform_5(%arg0: i32, %arg1: i32) -> (i32, i32) {
    %c1_i32 = arith.constant 1 : i32
    %0 = arith.subi %arg1, %c1_i32 : i32
    %c0_i32 = arith.constant 0 : i32
    %1 = arith.maxsi %0, %c0_i32 : i32
    %c0_i32_0 = arith.constant 0 : i32
    return %arg0, %1 : i32, i32
  }
}

</mosaic_0001>

<llo_original>
// kernel: autorec_forward.1
$region0: #{autorec_forward.1}
  #allocation0 [shape = 'u32[]', space=smem, size = 0x4, offset = 0x4, fixed_abs, tag = 'smem constant byte address 0x4 - core index']
  #allocation1 [shape = 'u32[144,128]{1,0:T(1,128)}', space=vmem, size = 0x12000, scoped, tag = 'internal scratch']
  #allocation2 [shape = 'f32[8,512]{1,0:T(8,128)}', space=vmem, size = 0x4000, scoped, tag = 'scratch operand']
  #allocation3 [shape = 'bf16[8,512]{1,0:T(8,128)(2,1)}', space=vmem, size = 0x2000, scoped, tag = 'scratch operand']
  %s0 = inlined_call_operand.vmem [shape: bf16[8,256], index: 0, kind: input, shape index: {}]
  %s1 = inlined_call_operand.vmem [shape: bf16[256,512], index: 1, kind: input, shape index: {}]
  %s2 = inlined_call_operand.vmem [shape: f32[1,512], index: 2, kind: input, shape index: {}]
  %s3 = inlined_call_operand.vmem [shape: bf16[1,512,256], index: 3, kind: input, shape index: {}]
  %s4 = inlined_call_operand.vmem [shape: f32[1,256], index: 4, kind: input, shape index: {}]
  %s5 = inlined_call_operand.hbm [shape: f32[8,256], index: 5, kind: output, shape index: {}]
  %s6 = sld [smem:[#allocation0]]
  $region69: #{autorec_forward.1} parent=0
    _
  %s8 = ssub.s32 1, %s6
  %s9 = scalar_select 0, %s8, %s6
  $region1: #{autorec_forward.1} parent=0
    #allocation4 [shape = 'u8[16384]{0}', space=vmem, size = 0x4000, scoped, tag = 'output window, operand 0']
    #allocation5 [shape = 's32[2]{0}', space=sflag, size = 0x8, scoped, tag = 'scoped memory for autorec_forward.1']
    %10 = vsyncpa [#allocation5], 0
    %s11 = scalar_lea.sflag [#allocation5], 1
    %12 = vsyncpa %s11, 0
    loop: start=0, step=1, limit=4
    $region2: #{autorec_forward.1} parent=1 // loop_pre_header
      _
    $region3: #{autorec_forward.1} parent=1 // loop_header
      %s14 = sphi 0, %s18
      %p15 = scmp.ge.s32.totalorder %s14, 4
      %s21 = sphi 0, %s33
      %s22 = sphi 0, %s29
      %s23 = sphi 0, %s21
      %s24 = sphi 0, %s22
      %s25 = sphi 0, %s23
      %s26 = sphi 0, %s24
      %s42 = sphi 0, %s44
      %s45 = sphi 0, %s42
      %s46 = sphi 0, %s45
      %s62 = sphi 0, %s46
      %s72 = sphi 0, %s74
      %s75 = sphi 0, %s72
      %s76 = sphi 0, %s75
      %s92 = sphi 0, %s76
      %s96 = sphi 0, %s96
      %s98 = sphi 0, %s96
      %s99 = sphi 0, %s98
      %s113 = sphi 0, %s99
      %s125 = sphi 0, %s127
      %s128 = sphi 0, %s125
      %s129 = sphi 0, %s128
      %s145 = sphi 0, %s129
      %s157 = sphi 0, %s159
      %s160 = sphi 0, %s157
      %s161 = sphi 0, %s160
      %s177 = sphi 0, %s161
      %s191 = sphi 0, %s193
      %s194 = sphi 0, %s191
      %s195 = sphi 0, %s194
      %s211 = sphi 0, %s195
    $region4: #{autorec_forward.1} parent=1 // loop_header_branch
      %17 = sbr.rel (%p15) target = $region8
    $region5: #{autorec_forward.1} parent=1 // loop_body
      %s19 = ssub.s32 %s14, 1
      %s20 = ssub.s32 %s14, 2
      %s27 = sadd.s32 1, %s22
      %p28 = scmp.ge.s32.totalorder %s27, 2
      %s29 = scalar_select %p28, 0, %s27
      %s30 = sadd.s32 1, %s21
      %s31 = scalar_select %p28, %s30, %s21
      %p32 = scmp.ge.s32.totalorder %s31, 1
      %s33 = scalar_select %p32, 0, %s31
      %p34 = scmp.lt.s32.totalorder %s22, 0
      %s35 = scalar_select %p34, %s22, 0
      %p36 = scmp.lt.s32.totalorder %s29, 0
      %s37 = scalar_select %p36, %s29, 0
      %s38 = ssub.s32 %s21, %s33
      %s39 = ssub.s32 %s35, %s37
      %s40 = sor.u32 %s38, %s39
      %p41 = scmp.eq.s32.totalorder %s40, 0
      %s43 = sadd.s32 %s42, 1
      %s44 = scalar_select %p41, %s42, %s43
      %p47 = pneg %p41
      %p48 = scmp.eq.s32.totalorder %s14, 1
      %p49 = por %p47, %p48
      %p50 = scmp.ne.s32.totalorder %s42, %s45
      %p51 = scmp.eq.s32.totalorder %s14, 0
      %p52 = por %p50, %p51
      %p53 = scmp.ne.s32.totalorder %s42, %s45
      %p54 = scmp.eq.s32.totalorder %s19, 1
      %p55 = por %p53, %p54
      %p56 = scmp.ne.s32.totalorder %s45, %s46
      %p57 = scmp.eq.s32.totalorder %s19, 0
      %p58 = por %p56, %p57
      %p59 = scmp.ne.s32.totalorder %s45, %s46
      %p60 = scmp.eq.s32.totalorder %s20, 1
      %p61 = por %p59, %p60
      %p63 = scmp.ne.s32.totalorder %s46, %s62
      %p64 = scmp.eq.s32.totalorder %s20, 0
      %p65 = por %p63, %p64
      %p66 = scmp.lt.s32.totalorder %s22, 0
      %s67 = scalar_select %p66, %s22, 0
      %p68 = scmp.lt.s32.totalorder %s29, 0
      %s69 = scalar_select %p68, %s29, 0
      %s70 = ssub.s32 %s67, %s69
      %p71 = scmp.eq.s32.totalorder %s70, 0
      %s73 = sadd.s32 %s72, 1
      %s74 = scalar_select %p71, %s72, %s73
      %p77 = pneg %p71
      %p78 = scmp.eq.s32.totalorder %s14, 1
      %p79 = por %p77, %p78
      %p80 = scmp.ne.s32.totalorder %s72, %s75
      %p81 = scmp.eq.s32.totalorder %s14, 0
      %p82 = por %p80, %p81
      %p83 = scmp.ne.s32.totalorder %s72, %s75
      %p84 = scmp.eq.s32.totalorder %s19, 1
      %p85 = por %p83, %p84
      %p86 = scmp.ne.s32.totalorder %s75, %s76
      %p87 = scmp.eq.s32.totalorder %s19, 0
      %p88 = por %p86, %p87
      %p89 = scmp.ne.s32.totalorder %s75, %s76
      %p90 = scmp.eq.s32.totalorder %s20, 1
      %p91 = por %p89, %p90
      %p93 = scmp.ne.s32.totalorder %s76, %s92
      %p94 = scmp.eq.s32.totalorder %s20, 0
      %p95 = por %p93, %p94
      %s97 = sadd.s32 %s96, 1
      %p100 = scmp.eq.s32.totalorder %s14, 1
      %p101 = scmp.ne.s32.totalorder %s96, %s98
      %p102 = scmp.eq.s32.totalorder %s14, 0
      %p103 = por %p101, %p102
      %p104 = scmp.ne.s32.totalorder %s96, %s98
      %p105 = scmp.eq.s32.totalorder %s19, 1
      %p106 = por %p104, %p105
      %p107 = scmp.ne.s32.totalorder %s98, %s99
      %p108 = scmp.eq.s32.totalorder %s19, 0
      %p109 = por %p107, %p108
      %p110 = scmp.ne.s32.totalorder %s98, %s99
      %p111 = scmp.eq.s32.totalorder %s20, 1
      %p112 = por %p110, %p111
      %p114 = scmp.ne.s32.totalorder %s99, %s113
      %p115 = scmp.eq.s32.totalorder %s20, 0
      %p116 = por %p114, %p115
      %s117 = ssub.s32 %s22, 1
      %p118 = scmp.gt.s32.totalorder %s117, 0
      %s119 = scalar_select %p118, %s117, 0
      %s120 = ssub.s32 %s29, 1
      %p121 = scmp.gt.s32.totalorder %s120, 0
      %s122 = scalar_select %p121, %s120, 0
      %s123 = ssub.s32 %s119, %s122
      %p124 = scmp.eq.s32.totalorder %s123, 0
      %s126 = sadd.s32 %s125, 1
      %s127 = scalar_select %p124, %s125, %s126
      %p130 = pneg %p124
      %p131 = scmp.eq.s32.totalorder %s14, 1
      %p132 = por %p130, %p131
      %p133 = scmp.ne.s32.totalorder %s125, %s128
      %p134 = scmp.eq.s32.totalorder %s14, 0
      %p135 = por %p133, %p134
      %p136 = scmp.ne.s32.totalorder %s125, %s128
      %p137 = scmp.eq.s32.totalorder %s19, 1
      %p138 = por %p136, %p137
      %p139 = scmp.ne.s32.totalorder %s128, %s129
      %p140 = scmp.eq.s32.totalorder %s19, 0
      %p141 = por %p139, %p140
      %p142 = scmp.ne.s32.totalorder %s128, %s129
      %p143 = scmp.eq.s32.totalorder %s20, 1
      %p144 = por %p142, %p143
      %p146 = scmp.ne.s32.totalorder %s129, %s145
      %p147 = scmp.eq.s32.totalorder %s20, 0
      %p148 = por %p146, %p147
      %s149 = ssub.s32 %s22, 1
      %p150 = scmp.gt.s32.totalorder %s149, 0
      %s151 = scalar_select %p150, %s149, 0
      %s152 = ssub.s32 %s29, 1
      %p153 = scmp.gt.s32.totalorder %s152, 0
      %s154 = scalar_select %p153, %s152, 0
      %s155 = ssub.s32 %s151, %s154
      %p156 = scmp.eq.s32.totalorder %s155, 0
      %s158 = sadd.s32 %s157, 1
      %s159 = scalar_select %p156, %s157, %s158
      %p162 = pneg %p156
      %p163 = scmp.eq.s32.totalorder %s14, 1
      %p164 = por %p162, %p163
      %p165 = scmp.ne.s32.totalorder %s157, %s160
      %p166 = scmp.eq.s32.totalorder %s14, 0
      %p167 = por %p165, %p166
      %p168 = scmp.ne.s32.totalorder %s157, %s160
      %p169 = scmp.eq.s32.totalorder %s19, 1
      %p170 = por %p168, %p169
      %p171 = scmp.ne.s32.totalorder %s160, %s161
      %p172 = scmp.eq.s32.totalorder %s19, 0
      %p173 = por %p171, %p172
      %p174 = scmp.ne.s32.totalorder %s160, %s161
      %p175 = scmp.eq.s32.totalorder %s20, 1
      %p176 = por %p174, %p175
      %p178 = scmp.ne.s32.totalorder %s161, %s177
      %p179 = scmp.eq.s32.totalorder %s20, 0
      %p180 = por %p178, %p179
      %s181 = ssub.s32 %s22, 1
      %p182 = scmp.gt.s32.totalorder %s181, 0
      %s183 = scalar_select %p182, %s181, 0
      %s184 = ssub.s32 %s29, 1
      %p185 = scmp.gt.s32.totalorder %s184, 0
      %s186 = scalar_select %p185, %s184, 0
      %s187 = ssub.s32 %s21, %s33
      %s188 = ssub.s32 %s183, %s186
      %s189 = sor.u32 %s187, %s188
      %p190 = scmp.eq.s32.totalorder %s189, 0
      %s192 = sadd.s32 %s191, 1
      %s193 = scalar_select %p190, %s191, %s192
      %p196 = pneg %p190
      %p197 = scmp.eq.s32.totalorder %s14, 1
      %p198 = por %p196, %p197
      %p199 = scmp.ne.s32.totalorder %s191, %s194
      %p200 = scmp.eq.s32.totalorder %s14, 0
      %p201 = por %p199, %p200
      %p202 = scmp.ne.s32.totalorder %s191, %s194
      %p203 = scmp.eq.s32.totalorder %s19, 1
      %p204 = por %p202, %p203
      %p205 = scmp.ne.s32.totalorder %s194, %s195
      %p206 = scmp.eq.s32.totalorder %s19, 0
      %p207 = por %p205, %p206
      %p208 = scmp.ne.s32.totalorder %s194, %s195
      %p209 = scmp.eq.s32.totalorder %s20, 1
      %p210 = por %p208, %p209
      %p212 = scmp.ne.s32.totalorder %s195, %s211
      %p213 = scmp.eq.s32.totalorder %s20, 0
      %p214 = por %p212, %p213
      %p215 = scmp.le.s32.totalorder 1, %s14
      %p216 = scmp.lt.s32.totalorder %s14, 3
      %p217 = pnand %p215, %p216
      %p218 = pneg %p217
      // Predicated region
      $region9: #{autorec_forward.1} parent=5 // pred_check
        _
      $region10: #{autorec_forward.1} parent=5 // pred_check_branch
        %220 = sbr.rel (%p217) target = $region12
      $region11: #{autorec_forward.1} parent=5 // pred_region
        %s221 = ssub.s32 %s14, 1
        // Predicated region
        $region13: #{autorec_forward.1} parent=11 // pred_check
          %p222 = pneg %p109
        $region14: #{autorec_forward.1} parent=11 // pred_check_branch
          %224 = sbr.rel (%p222) target = $region16
        $region15: #{autorec_forward.1} parent=11 // pred_region
          _
        $region16: #{autorec_forward.1} parent=11 // pred_fallthru
          _
      $region12: #{autorec_forward.1} parent=5 // pred_fallthru
        _
      %p225 = scmp.lt.s32.totalorder %s14, 2
      // Predicated region
      $region17: #{autorec_forward.1} parent=5 // pred_check
        %p226 = pneg %p225
      $region18: #{autorec_forward.1} parent=5 // pred_check_branch
        %228 = sbr.rel (%p226) target = $region20
      $region19: #{autorec_forward.1} parent=5 // pred_region
        // Predicated region
        $region21: #{autorec_forward.1} parent=19 // pred_check
          %p229 = pneg %p52
        $region22: #{autorec_forward.1} parent=19 // pred_check_branch
          %231 = sbr.rel (%p229) target = $region24
        $region23: #{autorec_forward.1} parent=19 // pred_region
          %p232 = scmp.lt.s32.totalorder %s22, 0
          %s233 = scalar_select %p232, %s22, 0
          %s234 = smul.u32 2, %s233
          %p235 = scmp.lt.s32.totalorder %s21, 0
          %s236 = scalar_select %p235, %s21, 0
          %p237 = scmp.lt.s32.totalorder %s234, 1
          %s238 = scalar_select %p237, %s234, 1
          %s239 = smul.addr %s236, 2
          %s240 = sadd.s32 %s238, %s239
          %s241 = smul.addr %s240, 4
          %s242 = scalar_lea.vmem %s0, %s241
          %p243 = scmp.lt.s32.totalorder %s22, 0
          %s244 = scalar_select %p243, %s22, 0
          %s245 = smul.u32 2, %s244
        $region24: #{autorec_forward.1} parent=19 // pred_fallthru
          _
        // Predicated region
        $region25: #{autorec_forward.1} parent=19 // pred_check
          %p246 = pneg %p82
        $region26: #{autorec_forward.1} parent=19 // pred_check_branch
          %248 = sbr.rel (%p246) target = $region28
        $region27: #{autorec_forward.1} parent=19 // pred_region
          %p249 = scmp.lt.s32.totalorder %s22, 0
          %s250 = scalar_select %p249, %s22, 0
          %s251 = smul.u32 32, %s250
          %p252 = scmp.lt.s32.totalorder %s251, 31
          %s253 = scalar_select %p252, %s251, 31
          %s254 = smul.addr %s253, 4
          %s255 = smul.addr %s254, 4
          %s256 = scalar_lea.vmem %s1, %s255
          %p257 = scmp.lt.s32.totalorder %s22, 0
          %s258 = scalar_select %p257, %s22, 0
          %s259 = smul.u32 32, %s258
        $region28: #{autorec_forward.1} parent=19 // pred_fallthru
          _
        // Predicated region
        $region29: #{autorec_forward.1} parent=19 // pred_check
          %p260 = pneg %p135
        $region30: #{autorec_forward.1} parent=19 // pred_check_branch
          %262 = sbr.rel (%p260) target = $region32
        $region31: #{autorec_forward.1} parent=19 // pred_region
          %s263 = ssub.s32 %s22, 1
          %p264 = scmp.gt.s32.totalorder %s263, 0
          %s265 = scalar_select %p264, %s263, 0
          %p266 = scmp.lt.s32.totalorder %s265, 0
          %s267 = scalar_select %p266, %s265, 0
          %s268 = smul.addr %s267, 128
          %s269 = smul.addr %s268, 4
          %s270 = scalar_lea.vmem %s3, %s269
          %s271 = ssub.s32 %s22, 1
          %p272 = scmp.gt.s32.totalorder %s271, 0
          %s273 = scalar_select %p272, %s271, 0
        $region32: #{autorec_forward.1} parent=19 // pred_fallthru
          _
        // Predicated region
        $region33: #{autorec_forward.1} parent=19 // pred_check
          %p274 = pneg %p167
        $region34: #{autorec_forward.1} parent=19 // pred_check_branch
          %276 = sbr.rel (%p274) target = $region36
        $region35: #{autorec_forward.1} parent=19 // pred_region
          %s277 = ssub.s32 %s22, 1
          %p278 = scmp.gt.s32.totalorder %s277, 0
          %s279 = scalar_select %p278, %s277, 0
          %s280 = smul.u32 2, %s279
          %p281 = scmp.lt.s32.totalorder %s280, 1
          %s282 = scalar_select %p281, %s280, 1
          %s283 = scalar_lea.vmem %s4, %s282
          %s284 = ssub.s32 %s22, 1
          %p285 = scmp.gt.s32.totalorder %s284, 0
          %s286 = scalar_select %p285, %s284, 0
          %s287 = smul.u32 2, %s286
        $region36: #{autorec_forward.1} parent=19 // pred_fallthru
          _
      $region20: #{autorec_forward.1} parent=5 // pred_fallthru
        _
      %p288 = scmp.le.s32.totalorder 1, %s14
      %p289 = scmp.lt.s32.totalorder %s14, 3
      %p290 = pnand %p288, %p289
      %p291 = pneg %p290
      // Predicated region
      $region37: #{autorec_forward.1} parent=5 // pred_check
        _
      $region38: #{autorec_forward.1} parent=5 // pred_check_branch
        %293 = sbr.rel (%p290) target = $region40
      $region39: #{autorec_forward.1} parent=5 // pred_region
        %s294 = ssub.s32 %s14, 1
        %p295 = scmp.lt.s32.totalorder %s24, 0
        %s296 = scalar_select %p295, %s24, 0
        %s297 = smul.u32 2, %s296
        %p298 = scmp.lt.s32.totalorder %s23, 0
        %s299 = scalar_select %p298, %s23, 0
        %p300 = scmp.lt.s32.totalorder %s297, 1
        %s301 = scalar_select %p300, %s297, 1
        %s302 = smul.addr %s299, 2
        %s303 = sadd.s32 %s301, %s302
        %s304 = smul.addr %s303, 4
        %s305 = scalar_lea.vmem %s0, %s304
        %p306 = pneg %p58
        %p307 = pneg %p55
        %p308 = scmp.lt.s32.totalorder %s24, 0
        %s309 = scalar_select %p308, %s24, 0
        %s310 = smul.u32 32, %s309
        %p311 = scmp.lt.s32.totalorder %s310, 31
        %s312 = scalar_select %p311, %s310, 31
        %s313 = smul.addr %s312, 4
        %s314 = smul.addr %s313, 4
        %s315 = scalar_lea.vmem %s1, %s314
        %p316 = pneg %p88
        %p317 = pneg %p85
        %p318 = pneg %p109
        %p319 = pneg %p106
        %s320 = ssub.s32 %s24, 1
        %p321 = scmp.gt.s32.totalorder %s320, 0
        %s322 = scalar_select %p321, %s320, 0
        %p323 = scmp.lt.s32.totalorder %s322, 0
        %s324 = scalar_select %p323, %s322, 0
        %s325 = smul.addr %s324, 128
        %s326 = smul.addr %s325, 4
        %s327 = scalar_lea.vmem %s3, %s326
        %p328 = pneg %p141
        %p329 = pneg %p138
        %s330 = ssub.s32 %s24, 1
        %p331 = scmp.gt.s32.totalorder %s330, 0
        %s332 = scalar_select %p331, %s330, 0
        %s333 = smul.u32 2, %s332
        %p334 = scmp.lt.s32.totalorder %s333, 1
        %s335 = scalar_select %p334, %s333, 1
        %s336 = scalar_lea.vmem %s4, %s335
        %p337 = pneg %p173
        %p338 = pneg %p170
        %p339 = pneg %p207
        %p340 = pneg %p204
        %s341 = sand.u32 %s194, 1
        %s342 = scalar_lea.sflag [#allocation5], %s341
        %s343 = sand.u32 %s194, 1
        %s344 = smul.addr %s343, 16
        %s345 = scalar_lea.vmem [#allocation4], %s344
        %p346 = scmp.lt.s32.totalorder %s24, 0
        %s347 = scalar_select %p346, %s24, 0
        %s348 = smul.u32 2, %s347
        %p349 = scmp.lt.s32.totalorder %s23, 0
        %s350 = scalar_select %p349, %s23, 0
        %p351 = scmp.lt.s32.totalorder %s348, 1
        %s352 = scalar_select %p351, %s348, 1
        %s353 = smul.addr %s350, 2
        %s354 = sadd.s32 %s352, %s353
        %s355 = smul.addr %s354, 4
        %s356 = scalar_lea.vmem %s0, %s355
        %p357 = scmp.lt.s32.totalorder %s24, 0
        %s358 = scalar_select %p357, %s24, 0
        %s359 = smul.u32 2, %s358
        %p360 = scmp.lt.s32.totalorder %s24, 0
        %s361 = scalar_select %p360, %s24, 0
        %s362 = smul.u32 32, %s361
        %p363 = scmp.lt.s32.totalorder %s362, 31
        %s364 = scalar_select %p363, %s362, 31
        %s365 = smul.addr %s364, 4
        %s366 = smul.addr %s365, 4
        %s367 = scalar_lea.vmem %s1, %s366
        %p368 = scmp.lt.s32.totalorder %s24, 0
        %s369 = scalar_select %p368, %s24, 0
        %s370 = smul.u32 32, %s369
        %s371 = ssub.s32 %s24, 1
        %p372 = scmp.gt.s32.totalorder %s371, 0
        %s373 = scalar_select %p372, %s371, 0
        %p374 = scmp.lt.s32.totalorder %s373, 0
        %s375 = scalar_select %p374, %s373, 0
        %s376 = smul.addr %s375, 128
        %s377 = smul.addr %s376, 4
        %s378 = scalar_lea.vmem %s3, %s377
        %s379 = ssub.s32 %s24, 1
        %p380 = scmp.gt.s32.totalorder %s379, 0
        %s381 = scalar_select %p380, %s379, 0
        %s382 = ssub.s32 %s24, 1
        %p383 = scmp.gt.s32.totalorder %s382, 0
        %s384 = scalar_select %p383, %s382, 0
        %s385 = smul.u32 2, %s384
        %p386 = scmp.lt.s32.totalorder %s385, 1
        %s387 = scalar_select %p386, %s385, 1
        %s388 = scalar_lea.vmem %s4, %s387
        %s389 = ssub.s32 %s24, 1
        %p390 = scmp.gt.s32.totalorder %s389, 0
        %s391 = scalar_select %p390, %s389, 0
        %s392 = smul.u32 2, %s391
        %s393 = ssub.s32 %s24, 1
        %p394 = scmp.gt.s32.totalorder %s393, 0
        %s395 = scalar_select %p394, %s393, 0
        %s396 = smul.u32 2, %s395
        %p397 = scmp.eq.s32.totalorder %s24, 0
        // Predicated region
        $region41: #{autorec_forward.1} parent=39 // pred_check
          %p398 = pneg %p397
        $region42: #{autorec_forward.1} parent=39 // pred_check_branch
          %400 = sbr.rel (%p398) target = $region44
        $region43: #{autorec_forward.1} parent=39 // pred_region
          %401 = vst [vmem:[#allocation2] sm:$0xff] 0.0
          %402 = vst [vmem:[#allocation2 + $0x8] sm:$0xff] 0.0
          %403 = vst [vmem:[#allocation2 + $0x10] sm:$0xff] 0.0
          %404 = vst [vmem:[#allocation2 + $0x18] sm:$0xff] 0.0
        $region44: #{autorec_forward.1} parent=39 // pred_fallthru
          _
        %p405 = scmp.lt.s32.totalorder %s24, 1
        // Predicated region
        $region45: #{autorec_forward.1} parent=39 // pred_check
          %p406 = pneg %p405
        $region46: #{autorec_forward.1} parent=39 // pred_check_branch
          %408 = sbr.rel (%p406) target = $region48
        $region47: #{autorec_forward.1} parent=39 // pred_region
          %v409 = vld [vmem:[#allocation2] sm:$0xff]
          %v410 = vld [vmem:[#allocation2 + $0x8] sm:$0xff]
          %v411 = vld [vmem:[#allocation2 + $0x10] sm:$0xff]
          %v412 = vld [vmem:[#allocation2 + $0x18] sm:$0xff]
          %v413 = vld [vmem:[%s356] sm:$0xff]
          %v414 = vld [vmem:[%s367] sm:$0xff]
          %v415 = vld [vmem:[%s367 + $0x8] sm:$0xff]
          %v416 = vld [vmem:[%s367 + $0x10] sm:$0xff]
          %v417 = vld [vmem:[%s367 + $0x18] sm:$0xff]
          %v418 = vld [vmem:[%s367 + $0x20] sm:$0xff]
          %v419 = vld [vmem:[%s367 + $0x28] sm:$0xff]
          %v420 = vld [vmem:[%s367 + $0x30] sm:$0xff]
          %v421 = vld [vmem:[%s367 + $0x38] sm:$0xff]
          %v422 = vld [vmem:[%s367 + $0x40] sm:$0xff]
          %v423 = vld [vmem:[%s367 + $0x48] sm:$0xff]
          %v424 = vld [vmem:[%s367 + $0x50] sm:$0xff]
          %v425 = vld [vmem:[%s367 + $0x58] sm:$0xff]
          %v426 = vld [vmem:[%s367 + $0x60] sm:$0xff]
          %v427 = vld [vmem:[%s367 + $0x68] sm:$0xff]
          %v428 = vld [vmem:[%s367 + $0x70] sm:$0xff]
          %v429 = vld [vmem:[%s367 + $0x78] sm:$0xff]
          %v430 = vld [vmem:[%s367 + $0x80] sm:$0xff]
          %v431 = vld [vmem:[%s367 + $0x88] sm:$0xff]
          %v432 = vld [vmem:[%s367 + $0x90] sm:$0xff]
          %v433 = vld [vmem:[%s367 + $0x98] sm:$0xff]
          %v434 = vld [vmem:[%s367 + $0xa0] sm:$0xff]
          %v435 = vld [vmem:[%s367 + $0xa8] sm:$0xff]
          %v436 = vld [vmem:[%s367 + $0xb0] sm:$0xff]
          %v437 = vld [vmem:[%s367 + $0xb8] sm:$0xff]
          %v438 = vld [vmem:[%s367 + $0xc0] sm:$0xff]
          %v439 = vld [vmem:[%s367 + $0xc8] sm:$0xff]
          %v440 = vld [vmem:[%s367 + $0xd0] sm:$0xff]
          %v441 = vld [vmem:[%s367 + $0xd8] sm:$0xff]
          %v442 = vld [vmem:[%s367 + $0xe0] sm:$0xff]
          %v443 = vld [vmem:[%s367 + $0xe8] sm:$0xff]
          %v444 = vld [vmem:[%s367 + $0xf0] sm:$0xff]
          %v445 = vld [vmem:[%s367 + $0xf8] sm:$0xff]
          %v446 = vld [vmem:[%s367 + $0x100] sm:$0xff]
          %v447 = vld [vmem:[%s367 + $0x108] sm:$0xff]
          %v448 = vld [vmem:[%s367 + $0x110] sm:$0xff]
          %v449 = vld [vmem:[%s367 + $0x118] sm:$0xff]
          %v450 = vld [vmem:[%s367 + $0x120] sm:$0xff]
          %v451 = vld [vmem:[%s367 + $0x128] sm:$0xff]
          %v452 = vld [vmem:[%s367 + $0x130] sm:$0xff]
          %v453 = vld [vmem:[%s367 + $0x138] sm:$0xff]
          %v454 = vld [vmem:[%s367 + $0x140] sm:$0xff]
          %v455 = vld [vmem:[%s367 + $0x148] sm:$0xff]
          %v456 = vld [vmem:[%s367 + $0x150] sm:$0xff]
          %v457 = vld [vmem:[%s367 + $0x158] sm:$0xff]
          %v458 = vld [vmem:[%s367 + $0x160] sm:$0xff]
          %v459 = vld [vmem:[%s367 + $0x168] sm:$0xff]
          %v460 = vld [vmem:[%s367 + $0x170] sm:$0xff]
          %v461 = vld [vmem:[%s367 + $0x178] sm:$0xff]
          %v462 = vld [vmem:[%s367 + $0x180] sm:$0xff]
          %v463 = vld [vmem:[%s367 + $0x188] sm:$0xff]
          %v464 = vld [vmem:[%s367 + $0x190] sm:$0xff]
          %v465 = vld [vmem:[%s367 + $0x198] sm:$0xff]
          %v466 = vld [vmem:[%s367 + $0x1a0] sm:$0xff]
          %v467 = vld [vmem:[%s367 + $0x1a8] sm:$0xff]
          %v468 = vld [vmem:[%s367 + $0x1b0] sm:$0xff]
          %v469 = vld [vmem:[%s367 + $0x1b8] sm:$0xff]
          %v470 = vld [vmem:[%s367 + $0x1c0] sm:$0xff]
          %v471 = vld [vmem:[%s367 + $0x1c8] sm:$0xff]
          %v472 = vld [vmem:[%s367 + $0x1d0] sm:$0xff]
          %v473 = vld [vmem:[%s367 + $0x1d8] sm:$0xff]
          %v474 = vld [vmem:[%s367 + $0x1e0] sm:$0xff]
          %v475 = vld [vmem:[%s367 + $0x1e8] sm:$0xff]
          %v476 = vld [vmem:[%s367 + $0x1f0] sm:$0xff]
          %v477 = vld [vmem:[%s367 + $0x1f8] sm:$0xff]
          %v479 = vunpack.c.l.b16 %v413
          %v480 = vunpack.c.h.b16 %v413
          %v481 = vpack.c.b16 %v479, %v479
          %v482 = vpack.c.b16 %v480, %v480
          %v549 = vunpack.c.l.b16 %v414
          %v550 = vunpack.c.h.b16 %v414
          %v551 = vunpack.c.l.b16 %v415
          %v552 = vunpack.c.h.b16 %v415
          %v553 = vunpack.c.l.b16 %v416
          %v554 = vunpack.c.h.b16 %v416
          %v555 = vunpack.c.l.b16 %v417
          %v556 = vunpack.c.h.b16 %v417
          %v557 = vunpack.c.l.b16 %v418
          %v558 = vunpack.c.h.b16 %v418
          %v559 = vunpack.c.l.b16 %v419
          %v560 = vunpack.c.h.b16 %v419
          %v561 = vunpack.c.l.b16 %v420
          %v562 = vunpack.c.h.b16 %v420
          %v563 = vunpack.c.l.b16 %v421
          %v564 = vunpack.c.h.b16 %v421
          %v565 = vunpack.c.l.b16 %v422
          %v566 = vunpack.c.h.b16 %v422
          %v567 = vunpack.c.l.b16 %v423
          %v568 = vunpack.c.h.b16 %v423
          %v569 = vunpack.c.l.b16 %v424
          %v570 = vunpack.c.h.b16 %v424
          %v571 = vunpack.c.l.b16 %v425
          %v572 = vunpack.c.h.b16 %v425
          %v573 = vunpack.c.l.b16 %v426
          %v574 = vunpack.c.h.b16 %v426
          %v575 = vunpack.c.l.b16 %v427
          %v576 = vunpack.c.h.b16 %v427
          %v577 = vunpack.c.l.b16 %v428
          %v578 = vunpack.c.h.b16 %v428
          %v579 = vunpack.c.l.b16 %v429
          %v580 = vunpack.c.h.b16 %v429
          %v581 = vunpack.c.l.b16 %v430
          %v582 = vunpack.c.h.b16 %v430
          %v583 = vunpack.c.l.b16 %v431
          %v584 = vunpack.c.h.b16 %v431
          %v585 = vunpack.c.l.b16 %v432
          %v586 = vunpack.c.h.b16 %v432
          %v587 = vunpack.c.l.b16 %v433
          %v588 = vunpack.c.h.b16 %v433
          %v589 = vunpack.c.l.b16 %v434
          %v590 = vunpack.c.h.b16 %v434
          %v591 = vunpack.c.l.b16 %v435
          %v592 = vunpack.c.h.b16 %v435
          %v593 = vunpack.c.l.b16 %v436
          %v594 = vunpack.c.h.b16 %v436
          %v595 = vunpack.c.l.b16 %v437
          %v596 = vunpack.c.h.b16 %v437
          %v597 = vunpack.c.l.b16 %v438
          %v598 = vunpack.c.h.b16 %v438
          %v599 = vunpack.c.l.b16 %v439
          %v600 = vunpack.c.h.b16 %v439
          %v601 = vunpack.c.l.b16 %v440
          %v602 = vunpack.c.h.b16 %v440
          %v603 = vunpack.c.l.b16 %v441
          %v604 = vunpack.c.h.b16 %v441
          %v605 = vunpack.c.l.b16 %v442
          %v606 = vunpack.c.h.b16 %v442
          %v607 = vunpack.c.l.b16 %v443
          %v608 = vunpack.c.h.b16 %v443
          %v609 = vunpack.c.l.b16 %v444
          %v610 = vunpack.c.h.b16 %v444
          %v611 = vunpack.c.l.b16 %v445
          %v612 = vunpack.c.h.b16 %v445
          %v613 = vunpack.c.l.b16 %v446
          %v614 = vunpack.c.h.b16 %v446
          %v615 = vunpack.c.l.b16 %v447
          %v616 = vunpack.c.h.b16 %v447
          %v617 = vunpack.c.l.b16 %v448
          %v618 = vunpack.c.h.b16 %v448
          %v619 = vunpack.c.l.b16 %v449
          %v620 = vunpack.c.h.b16 %v449
          %v621 = vunpack.c.l.b16 %v450
          %v622 = vunpack.c.h.b16 %v450
          %v623 = vunpack.c.l.b16 %v451
          %v624 = vunpack.c.h.b16 %v451
          %v625 = vunpack.c.l.b16 %v452
          %v626 = vunpack.c.h.b16 %v452
          %v627 = vunpack.c.l.b16 %v453
          %v628 = vunpack.c.h.b16 %v453
          %v629 = vunpack.c.l.b16 %v454
          %v630 = vunpack.c.h.b16 %v454
          %v631 = vunpack.c.l.b16 %v455
          %v632 = vunpack.c.h.b16 %v455
          %v633 = vunpack.c.l.b16 %v456
          %v634 = vunpack.c.h.b16 %v456
          %v635 = vunpack.c.l.b16 %v457
          %v636 = vunpack.c.h.b16 %v457
          %v637 = vunpack.c.l.b16 %v458
          %v638 = vunpack.c.h.b16 %v458
          %v639 = vunpack.c.l.b16 %v459
          %v640 = vunpack.c.h.b16 %v459
          %v641 = vunpack.c.l.b16 %v460
          %v642 = vunpack.c.h.b16 %v460
          %v643 = vunpack.c.l.b16 %v461
          %v644 = vunpack.c.h.b16 %v461
          %v645 = vunpack.c.l.b16 %v462
          %v646 = vunpack.c.h.b16 %v462
          %v647 = vunpack.c.l.b16 %v463
          %v648 = vunpack.c.h.b16 %v463
          %v649 = vunpack.c.l.b16 %v464
          %v650 = vunpack.c.h.b16 %v464
          %v651 = vunpack.c.l.b16 %v465
          %v652 = vunpack.c.h.b16 %v465
          %v653 = vunpack.c.l.b16 %v466
          %v654 = vunpack.c.h.b16 %v466
          %v655 = vunpack.c.l.b16 %v467
          %v656 = vunpack.c.h.b16 %v467
          %v657 = vunpack.c.l.b16 %v468
          %v658 = vunpack.c.h.b16 %v468
          %v659 = vunpack.c.l.b16 %v469
          %v660 = vunpack.c.h.b16 %v469
          %v661 = vunpack.c.l.b16 %v470
          %v662 = vunpack.c.h.b16 %v470
          %v663 = vunpack.c.l.b16 %v471
          %v664 = vunpack.c.h.b16 %v471
          %v665 = vunpack.c.l.b16 %v472
          %v666 = vunpack.c.h.b16 %v472
          %v667 = vunpack.c.l.b16 %v473
          %v668 = vunpack.c.h.b16 %v473
          %v669 = vunpack.c.l.b16 %v474
          %v670 = vunpack.c.h.b16 %v474
          %v671 = vunpack.c.l.b16 %v475
          %v672 = vunpack.c.h.b16 %v475
          %v673 = vunpack.c.l.b16 %v476
          %v674 = vunpack.c.h.b16 %v476
          %v675 = vunpack.c.l.b16 %v477
          %v676 = vunpack.c.h.b16 %v477
          %v677 = vpack.c.b16 %v553, %v549
          %v678 = vpack.c.b16 %v554, %v550
          %v679 = vpack.c.b16 %v555, %v551
          %v680 = vpack.c.b16 %v556, %v552
          %v681 = vpack.c.b16 %v561, %v557
          %v682 = vpack.c.b16 %v562, %v558
          %v683 = vpack.c.b16 %v563, %v559
          %v684 = vpack.c.b16 %v564, %v560
          %v685 = vpack.c.b16 %v569, %v565
          %v686 = vpack.c.b16 %v570, %v566
          %v687 = vpack.c.b16 %v571, %v567
          %v688 = vpack.c.b16 %v572, %v568
          %v689 = vpack.c.b16 %v577, %v573
          %v690 = vpack.c.b16 %v578, %v574
          %v691 = vpack.c.b16 %v579, %v575
          %v692 = vpack.c.b16 %v580, %v576
          %v693 = vpack.c.b16 %v585, %v581
          %v694 = vpack.c.b16 %v586, %v582
          %v695 = vpack.c.b16 %v587, %v583
          %v696 = vpack.c.b16 %v588, %v584
          %v697 = vpack.c.b16 %v593, %v589
          %v698 = vpack.c.b16 %v594, %v590
          %v699 = vpack.c.b16 %v595, %v591
          %v700 = vpack.c.b16 %v596, %v592
          %v701 = vpack.c.b16 %v601, %v597
          %v702 = vpack.c.b16 %v602, %v598
          %v703 = vpack.c.b16 %v603, %v599
          %v704 = vpack.c.b16 %v604, %v600
          %v705 = vpack.c.b16 %v609, %v605
          %v706 = vpack.c.b16 %v610, %v606
          %v707 = vpack.c.b16 %v611, %v607
          %v708 = vpack.c.b16 %v612, %v608
          %v709 = vpack.c.b16 %v617, %v613
          %v710 = vpack.c.b16 %v618, %v614
          %v711 = vpack.c.b16 %v619, %v615
          %v712 = vpack.c.b16 %v620, %v616
          %v713 = vpack.c.b16 %v625, %v621
          %v714 = vpack.c.b16 %v626, %v622
          %v715 = vpack.c.b16 %v627, %v623
          %v716 = vpack.c.b16 %v628, %v624
          %v717 = vpack.c.b16 %v633, %v629
          %v718 = vpack.c.b16 %v634, %v630
          %v719 = vpack.c.b16 %v635, %v631
          %v720 = vpack.c.b16 %v636, %v632
          %v721 = vpack.c.b16 %v641, %v637
          %v722 = vpack.c.b16 %v642, %v638
          %v723 = vpack.c.b16 %v643, %v639
          %v724 = vpack.c.b16 %v644, %v640
          %v725 = vpack.c.b16 %v649, %v645
          %v726 = vpack.c.b16 %v650, %v646
          %v727 = vpack.c.b16 %v651, %v647
          %v728 = vpack.c.b16 %v652, %v648
          %v729 = vpack.c.b16 %v657, %v653
          %v730 = vpack.c.b16 %v658, %v654
          %v731 = vpack.c.b16 %v659, %v655
          %v732 = vpack.c.b16 %v660, %v656
          %v733 = vpack.c.b16 %v665, %v661
          %v734 = vpack.c.b16 %v666, %v662
          %v735 = vpack.c.b16 %v667, %v663
          %v736 = vpack.c.b16 %v668, %v664
          %v737 = vpack.c.b16 %v673, %v669
          %v738 = vpack.c.b16 %v674, %v670
          %v739 = vpack.c.b16 %v675, %v671
          %v740 = vpack.c.b16 %v676, %v672
          %805 = vmatprep.subr.bf16.mxu0 %v678
          %806 = vmatpush1.bf16.msra.mxu0 %v677
          %807 = vmatprep.subr.bf16.mxu0 %v682
          %808 = vmatpush1.bf16.msra.mxu0 %v681
          %809 = vmatprep.subr.bf16.mxu0 %v686
          %810 = vmatpush1.bf16.msra.mxu0 %v685
          %811 = vmatprep.subr.bf16.mxu0 %v690
          %812 = vmatpush1.bf16.msra.mxu0 %v689
          %813 = vmatprep.subr.bf16.mxu0 %v694
          %814 = vmatpush1.bf16.msra.mxu0 %v693
          %815 = vmatprep.subr.bf16.mxu0 %v698
          %816 = vmatpush1.bf16.msra.mxu0 %v697
          %817 = vmatprep.subr.bf16.mxu0 %v702
          %818 = vmatpush1.bf16.msra.mxu0 %v701
          %819 = vmatprep.subr.bf16.mxu0 %v706
          %820 = vmatpush1.bf16.msra.mxu0 %v705
          %821 = vmatprep.subr.bf16.mxu0 %v710
          %822 = vmatpush1.bf16.msra.mxu0 %v709
          %823 = vmatprep.subr.bf16.mxu0 %v714
          %824 = vmatpush1.bf16.msra.mxu0 %v713
          %825 = vmatprep.subr.bf16.mxu0 %v718
          %826 = vmatpush1.bf16.msra.mxu0 %v717
          %827 = vmatprep.subr.bf16.mxu0 %v722
          %828 = vmatpush1.bf16.msra.mxu0 %v721
          %829 = vmatprep.subr.bf16.mxu0 %v726
          %830 = vmatpush1.bf16.msra.mxu0 %v725
          %831 = vmatprep.subr.bf16.mxu0 %v730
          %832 = vmatpush1.bf16.msra.mxu0 %v729
          %833 = vmatprep.subr.bf16.mxu0 %v734
          %834 = vmatpush1.bf16.msra.mxu0 %v733
          %835 = vmatprep.subr.bf16.mxu0 %v738
          %836 = vmatpush1.bf16.msra.mxu0 %v737
          %837 = vmatprep.mubr.bf16.mxu0 %v482
          %838 = vmatmul.mubr.bf16.gmra.mrb[0].mxu0 %v481
          %v839 = vpop.f32.mrb[0].mxu0
          %v840 = vadd.f32 0.0, %v839
          %v841 = vpop.f32.mrb[0].mxu0
          %v842 = vadd.f32 0.0, %v841
          %v843 = vpop.f32.mrb[0].mxu0
          %v844 = vpop.f32.mrb[0].mxu0
          %845 = vdwg.mxu0
          %846 = vmatprep.subr.bf16.mxu0 %v680
          %847 = vmatpush1.bf16.msra.mxu0 %v679
          %848 = vmatprep.subr.bf16.mxu0 %v684
          %849 = vmatpush1.bf16.msra.mxu0 %v683
          %850 = vmatprep.subr.bf16.mxu0 %v688
          %851 = vmatpush1.bf16.msra.mxu0 %v687
          %852 = vmatprep.subr.bf16.mxu0 %v692
          %853 = vmatpush1.bf16.msra.mxu0 %v691
          %854 = vmatprep.subr.bf16.mxu0 %v696
          %855 = vmatpush1.bf16.msra.mxu0 %v695
          %856 = vmatprep.subr.bf16.mxu0 %v700
          %857 = vmatpush1.bf16.msra.mxu0 %v699
          %858 = vmatprep.subr.bf16.mxu0 %v704
          %859 = vmatpush1.bf16.msra.mxu0 %v703
          %860 = vmatprep.subr.bf16.mxu0 %v708
          %861 = vmatpush1.bf16.msra.mxu0 %v707
          %862 = vmatprep.subr.bf16.mxu0 %v712
          %863 = vmatpush1.bf16.msra.mxu0 %v711
          %864 = vmatprep.subr.bf16.mxu0 %v716
          %865 = vmatpush1.bf16.msra.mxu0 %v715
          %866 = vmatprep.subr.bf16.mxu0 %v720
          %867 = vmatpush1.bf16.msra.mxu0 %v719
          %868 = vmatprep.subr.bf16.mxu0 %v724
          %869 = vmatpush1.bf16.msra.mxu0 %v723
          %870 = vmatprep.subr.bf16.mxu0 %v728
          %871 = vmatpush1.bf16.msra.mxu0 %v727
          %872 = vmatprep.subr.bf16.mxu0 %v732
          %873 = vmatpush1.bf16.msra.mxu0 %v731
          %874 = vmatprep.subr.bf16.mxu0 %v736
          %875 = vmatpush1.bf16.msra.mxu0 %v735
          %876 = vmatprep.subr.bf16.mxu0 %v740
          %877 = vmatpush1.bf16.msra.mxu0 %v739
          %878 = vmatprep.mubr.bf16.mxu0 %v482
          %879 = vmatmul.mubr.bf16.gmra.mrb[0].mxu0 %v481
          %v880 = vpop.f32.mrb[0].mxu0
          %v881 = vadd.f32 0.0, %v880
          %v882 = vpop.f32.mrb[0].mxu0
          %v883 = vadd.f32 0.0, %v882
          %v884 = vpop.f32.mrb[0].mxu0
          %v885 = vpop.f32.mrb[0].mxu0
          %886 = vdwg.mxu0
          %v887 = vadd.f32 %v409, %v840
          %v888 = vadd.f32 %v410, %v842
          %v889 = vadd.f32 %v411, %v881
          %v890 = vadd.f32 %v412, %v883
          %891 = vst [vmem:[#allocation2] sm:$0xff] %v887
          %892 = vst [vmem:[#allocation2 + $0x8] sm:$0xff] %v888
          %893 = vst [vmem:[#allocation2 + $0x10] sm:$0xff] %v889
          %894 = vst [vmem:[#allocation2 + $0x18] sm:$0xff] %v890
        $region48: #{autorec_forward.1} parent=39 // pred_fallthru
          _
        // Predicated region
        $region49: #{autorec_forward.1} parent=39 // pred_check
          %p895 = pneg %p397
        $region50: #{autorec_forward.1} parent=39 // pred_check_branch
          %897 = sbr.rel (%p895) target = $region52
        $region51: #{autorec_forward.1} parent=39 // pred_region
          %v898 = vld [vmem:[#allocation2] sm:$0xff]
          %v899 = vld [vmem:[#allocation2 + $0x8] sm:$0xff]
          %v900 = vld [vmem:[#allocation2 + $0x10] sm:$0xff]
          %v901 = vld [vmem:[#allocation2 + $0x18] sm:$0xff]
          %v902 = vld [vmem:[%s2] sm:$0xf]
          %v904 = vlaneseq
          %v905 = vshrl.u32 %v904, 7
          %v906 = vsub.s32 0, %v905
          %v907 = vrot.slane %v902, %v906
          %v908 = vlaneseq
          %v909 = vshrl.u32 %v908, 7
          %v910 = vsub.s32 1, %v909
          %v911 = vrot.slane %v902, %v910
          %v912 = vlaneseq
          %v913 = vshrl.u32 %v912, 7
          %v914 = vsub.s32 2, %v913
          %v915 = vrot.slane %v902, %v914
          %v916 = vlaneseq
          %v917 = vshrl.u32 %v916, 7
          %v918 = vsub.s32 3, %v917
          %v919 = vrot.slane %v902, %v918
          %v924 = vadd.f32 %v898, %v907
          %v925 = vadd.f32 %v899, %v911
          %v926 = vadd.f32 %v900, %v915
          %v927 = vadd.f32 %v901, %v919
          %v928 = vxor.u32 %v924, 2147483648
          %v929 = vxor.u32 %v925, 2147483648
          %v930 = vxor.u32 %v926, 2147483648
          %v931 = vxor.u32 %v927, 2147483648
          %v932 = vmul.f32 %v928, 1.442695
          %v933 = vpow.pop %v932
          %v934 = vmul.f32 %v929, 1.442695
          %v935 = vpow.pop %v934
          %v936 = vmul.f32 %v930, 1.442695
          %v937 = vpow.pop %v936
          %v938 = vmul.f32 %v931, 1.442695
          %v939 = vpow.pop %v938
          %v940 = vadd.f32 %v933, 1.0
          %v941 = vadd.f32 %v935, 1.0
          %v942 = vadd.f32 %v937, 1.0
          %v943 = vadd.f32 %v939, 1.0
          %v944 = vrcp.pop %v940
          %v945 = vmul.f32 1.0, %v944
          %v946 = vrcp.pop %v941
          %v947 = vmul.f32 1.0, %v946
          %v948 = vrcp.pop %v942
          %v949 = vmul.f32 1.0, %v948
          %v950 = vrcp.pop %v943
          %v951 = vmul.f32 1.0, %v950
          %v952 = vpack.c.bf16 %v945, %v945
          %v953 = vpack.c.bf16 %v947, %v947
          %v954 = vpack.c.bf16 %v949, %v949
          %v955 = vpack.c.bf16 %v951, %v951
          %v960 = vunpack.c.l.b16 %v952
          %v961 = vunpack.c.l.b16 %v953
          %v962 = vunpack.c.l.b16 %v954
          %v963 = vunpack.c.l.b16 %v955
          %v964 = vpack.c.b16 %v961, %v960
          %v965 = vpack.c.b16 %v963, %v962
          %968 = vst [vmem:[#allocation3] sm:$0xff] %v964
          %969 = vst [vmem:[#allocation3 + $0x8] sm:$0xff] %v965
        $region52: #{autorec_forward.1} parent=39 // pred_fallthru
          _
        %p970 = scmp.ge.s32.totalorder %s24, 1
        // Predicated region
        $region53: #{autorec_forward.1} parent=39 // pred_check
          %p971 = pneg %p970
        $region54: #{autorec_forward.1} parent=39 // pred_check_branch
          %973 = sbr.rel (%p971) target = $region56
        $region55: #{autorec_forward.1} parent=39 // pred_region
          %v974 = vld [vmem:[#allocation3] sm:$0xff]
          %v975 = vld [vmem:[#allocation3 + $0x8] sm:$0xff]
          %v976 = vld [vmem:[%s378] sm:$0xff]
          %v977 = vld [vmem:[%s378 + $0x8] sm:$0xff]
          %v978 = vld [vmem:[%s378 + $0x10] sm:$0xff]
          %v979 = vld [vmem:[%s378 + $0x18] sm:$0xff]
          %v980 = vld [vmem:[%s378 + $0x20] sm:$0xff]
          %v981 = vld [vmem:[%s378 + $0x28] sm:$0xff]
          %v982 = vld [vmem:[%s378 + $0x30] sm:$0xff]
          %v983 = vld [vmem:[%s378 + $0x38] sm:$0xff]
          %v984 = vld [vmem:[%s378 + $0x40] sm:$0xff]
          %v985 = vld [vmem:[%s378 + $0x48] sm:$0xff]
          %v986 = vld [vmem:[%s378 + $0x50] sm:$0xff]
          %v987 = vld [vmem:[%s378 + $0x58] sm:$0xff]
          %v988 = vld [vmem:[%s378 + $0x60] sm:$0xff]
          %v989 = vld [vmem:[%s378 + $0x68] sm:$0xff]
          %v990 = vld [vmem:[%s378 + $0x70] sm:$0xff]
          %v991 = vld [vmem:[%s378 + $0x78] sm:$0xff]
          %v992 = vld [vmem:[%s378 + $0x80] sm:$0xff]
          %v993 = vld [vmem:[%s378 + $0x88] sm:$0xff]
          %v994 = vld [vmem:[%s378 + $0x90] sm:$0xff]
          %v995 = vld [vmem:[%s378 + $0x98] sm:$0xff]
          %v996 = vld [vmem:[%s378 + $0xa0] sm:$0xff]
          %v997 = vld [vmem:[%s378 + $0xa8] sm:$0xff]
          %v998 = vld [vmem:[%s378 + $0xb0] sm:$0xff]
          %v999 = vld [vmem:[%s378 + $0xb8] sm:$0xff]
          %v1000 = vld [vmem:[%s378 + $0xc0] sm:$0xff]
          %v1001 = vld [vmem:[%s378 + $0xc8] sm:$0xff]
          %v1002 = vld [vmem:[%s378 + $0xd0] sm:$0xff]
          %v1003 = vld [vmem:[%s378 + $0xd8] sm:$0xff]
          %v1004 = vld [vmem:[%s378 + $0xe0] sm:$0xff]
          %v1005 = vld [vmem:[%s378 + $0xe8] sm:$0xff]
          %v1006 = vld [vmem:[%s378 + $0xf0] sm:$0xff]
          %v1007 = vld [vmem:[%s378 + $0xf8] sm:$0xff]
          %v1008 = vld [vmem:[%s378 + $0x100] sm:$0xff]
          %v1009 = vld [vmem:[%s378 + $0x108] sm:$0xff]
          %v1010 = vld [vmem:[%s378 + $0x110] sm:$0xff]
          %v1011 = vld [vmem:[%s378 + $0x118] sm:$0xff]
          %v1012 = vld [vmem:[%s378 + $0x120] sm:$0xff]
          %v1013 = vld [vmem:[%s378 + $0x128] sm:$0xff]
          %v1014 = vld [vmem:[%s378 + $0x130] sm:$0xff]
          %v1015 = vld [vmem:[%s378 + $0x138] sm:$0xff]
          %v1016 = vld [vmem:[%s378 + $0x140] sm:$0xff]
          %v1017 = vld [vmem:[%s378 + $0x148] sm:$0xff]
          %v1018 = vld [vmem:[%s378 + $0x150] sm:$0xff]
          %v1019 = vld [vmem:[%s378 + $0x158] sm:$0xff]
          %v1020 = vld [vmem:[%s378 + $0x160] sm:$0xff]
          %v1021 = vld [vmem:[%s378 + $0x168] sm:$0xff]
          %v1022 = vld [vmem:[%s378 + $0x170] sm:$0xff]
          %v1023 = vld [vmem:[%s378 + $0x178] sm:$0xff]
          %v1024 = vld [vmem:[%s378 + $0x180] sm:$0xff]
          %v1025 = vld [vmem:[%s378 + $0x188] sm:$0xff]
          %v1026 = vld [vmem:[%s378 + $0x190] sm:$0xff]
          %v1027 = vld [vmem:[%s378 + $0x198] sm:$0xff]
          %v1028 = vld [vmem:[%s378 + $0x1a0] sm:$0xff]
          %v1029 = vld [vmem:[%s378 + $0x1a8] sm:$0xff]
          %v1030 = vld [vmem:[%s378 + $0x1b0] sm:$0xff]
          %v1031 = vld [vmem:[%s378 + $0x1b8] sm:$0xff]
          %v1032 = vld [vmem:[%s378 + $0x1c0] sm:$0xff]
          %v1033 = vld [vmem:[%s378 + $0x1c8] sm:$0xff]
          %v1034 = vld [vmem:[%s378 + $0x1d0] sm:$0xff]
          %v1035 = vld [vmem:[%s378 + $0x1d8] sm:$0xff]
          %v1036 = vld [vmem:[%s378 + $0x1e0] sm:$0xff]
          %v1037 = vld [vmem:[%s378 + $0x1e8] sm:$0xff]
          %v1038 = vld [vmem:[%s378 + $0x1f0] sm:$0xff]
          %v1039 = vld [vmem:[%s378 + $0x1f8] sm:$0xff]
          %v1040 = vld [vmem:[%s388] sm:$0x3]
          %v1042 = vlaneseq
          %v1043 = vshrl.u32 %v1042, 7
          %v1044 = vsub.s32 0, %v1043
          %v1045 = vrot.slane %v1040, %v1044
          %v1046 = vlaneseq
          %v1047 = vshrl.u32 %v1046, 7
          %v1048 = vsub.s32 1, %v1047
          %v1049 = vrot.slane %v1040, %v1048
          %v1054 = vunpack.c.l.b16 %v974
          %v1055 = vunpack.c.h.b16 %v974
          %v1056 = vunpack.c.l.b16 %v975
          %v1057 = vunpack.c.h.b16 %v975
          %v1058 = vpack.c.b16 %v1054, %v1054
          %v1059 = vpack.c.b16 %v1055, %v1055
          %v1060 = vpack.c.b16 %v1056, %v1056
          %v1061 = vpack.c.b16 %v1057, %v1057
          %v1130 = vunpack.c.l.b16 %v976
          %v1131 = vunpack.c.h.b16 %v976
          %v1132 = vunpack.c.l.b16 %v977
          %v1133 = vunpack.c.h.b16 %v977
          %v1134 = vunpack.c.l.b16 %v978
          %v1135 = vunpack.c.h.b16 %v978
          %v1136 = vunpack.c.l.b16 %v979
          %v1137 = vunpack.c.h.b16 %v979
          %v1138 = vunpack.c.l.b16 %v980
          %v1139 = vunpack.c.h.b16 %v980
          %v1140 = vunpack.c.l.b16 %v981
          %v1141 = vunpack.c.h.b16 %v981
          %v1142 = vunpack.c.l.b16 %v982
          %v1143 = vunpack.c.h.b16 %v982
          %v1144 = vunpack.c.l.b16 %v983
          %v1145 = vunpack.c.h.b16 %v983
          %v1146 = vunpack.c.l.b16 %v984
          %v1147 = vunpack.c.h.b16 %v984
          %v1148 = vunpack.c.l.b16 %v985
          %v1149 = vunpack.c.h.b16 %v985
          %v1150 = vunpack.c.l.b16 %v986
          %v1151 = vunpack.c.h.b16 %v986
          %v1152 = vunpack.c.l.b16 %v987
          %v1153 = vunpack.c.h.b16 %v987
          %v1154 = vunpack.c.l.b16 %v988
          %v1155 = vunpack.c.h.b16 %v988
          %v1156 = vunpack.c.l.b16 %v989
          %v1157 = vunpack.c.h.b16 %v989
          %v1158 = vunpack.c.l.b16 %v990
          %v1159 = vunpack.c.h.b16 %v990
          %v1160 = vunpack.c.l.b16 %v991
          %v1161 = vunpack.c.h.b16 %v991
          %v1162 = vunpack.c.l.b16 %v992
          %v1163 = vunpack.c.h.b16 %v992
          %v1164 = vunpack.c.l.b16 %v993
          %v1165 = vunpack.c.h.b16 %v993
          %v1166 = vunpack.c.l.b16 %v994
          %v1167 = vunpack.c.h.b16 %v994
          %v1168 = vunpack.c.l.b16 %v995
          %v1169 = vunpack.c.h.b16 %v995
          %v1170 = vunpack.c.l.b16 %v996
          %v1171 = vunpack.c.h.b16 %v996
          %v1172 = vunpack.c.l.b16 %v997
          %v1173 = vunpack.c.h.b16 %v997
          %v1174 = vunpack.c.l.b16 %v998
          %v1175 = vunpack.c.h.b16 %v998
          %v1176 = vunpack.c.l.b16 %v999
          %v1177 = vunpack.c.h.b16 %v999
          %v1178 = vunpack.c.l.b16 %v1000
          %v1179 = vunpack.c.h.b16 %v1000
          %v1180 = vunpack.c.l.b16 %v1001
          %v1181 = vunpack.c.h.b16 %v1001
          %v1182 = vunpack.c.l.b16 %v1002
          %v1183 = vunpack.c.h.b16 %v1002
          %v1184 = vunpack.c.l.b16 %v1003
          %v1185 = vunpack.c.h.b16 %v1003
          %v1186 = vunpack.c.l.b16 %v1004
          %v1187 = vunpack.c.h.b16 %v1004
          %v1188 = vunpack.c.l.b16 %v1005
          %v1189 = vunpack.c.h.b16 %v1005
          %v1190 = vunpack.c.l.b16 %v1006
          %v1191 = vunpack.c.h.b16 %v1006
          %v1192 = vunpack.c.l.b16 %v1007
          %v1193 = vunpack.c.h.b16 %v1007
          %v1194 = vunpack.c.l.b16 %v1008
          %v1195 = vunpack.c.h.b16 %v1008
          %v1196 = vunpack.c.l.b16 %v1009
          %v1197 = vunpack.c.h.b16 %v1009
          %v1198 = vunpack.c.l.b16 %v1010
          %v1199 = vunpack.c.h.b16 %v1010
          %v1200 = vunpack.c.l.b16 %v1011
          %v1201 = vunpack.c.h.b16 %v1011
          %v1202 = vunpack.c.l.b16 %v1012
          %v1203 = vunpack.c.h.b16 %v1012
          %v1204 = vunpack.c.l.b16 %v1013
          %v1205 = vunpack.c.h.b16 %v1013
          %v1206 = vunpack.c.l.b16 %v1014
          %v1207 = vunpack.c.h.b16 %v1014
          %v1208 = vunpack.c.l.b16 %v1015
          %v1209 = vunpack.c.h.b16 %v1015
          %v1210 = vunpack.c.l.b16 %v1016
          %v1211 = vunpack.c.h.b16 %v1016
          %v1212 = vunpack.c.l.b16 %v1017
          %v1213 = vunpack.c.h.b16 %v1017
          %v1214 = vunpack.c.l.b16 %v1018
          %v1215 = vunpack.c.h.b16 %v1018
          %v1216 = vunpack.c.l.b16 %v1019
          %v1217 = vunpack.c.h.b16 %v1019
          %v1218 = vunpack.c.l.b16 %v1020
          %v1219 = vunpack.c.h.b16 %v1020
          %v1220 = vunpack.c.l.b16 %v1021
          %v1221 = vunpack.c.h.b16 %v1021
          %v1222 = vunpack.c.l.b16 %v1022
          %v1223 = vunpack.c.h.b16 %v1022
          %v1224 = vunpack.c.l.b16 %v1023
          %v1225 = vunpack.c.h.b16 %v1023
          %v1226 = vunpack.c.l.b16 %v1024
          %v1227 = vunpack.c.h.b16 %v1024
          %v1228 = vunpack.c.l.b16 %v1025
          %v1229 = vunpack.c.h.b16 %v1025
          %v1230 = vunpack.c.l.b16 %v1026
          %v1231 = vunpack.c.h.b16 %v1026
          %v1232 = vunpack.c.l.b16 %v1027
          %v1233 = vunpack.c.h.b16 %v1027
          %v1234 = vunpack.c.l.b16 %v1028
          %v1235 = vunpack.c.h.b16 %v1028
          %v1236 = vunpack.c.l.b16 %v1029
          %v1237 = vunpack.c.h.b16 %v1029
          %v1238 = vunpack.c.l.b16 %v1030
          %v1239 = vunpack.c.h.b16 %v1030
          %v1240 = vunpack.c.l.b16 %v1031
          %v1241 = vunpack.c.h.b16 %v1031
          %v1242 = vunpack.c.l.b16 %v1032
          %v1243 = vunpack.c.h.b16 %v1032
          %v1244 = vunpack.c.l.b16 %v1033
          %v1245 = vunpack.c.h.b16 %v1033
          %v1246 = vunpack.c.l.b16 %v1034
          %v1247 = vunpack.c.h.b16 %v1034
          %v1248 = vunpack.c.l.b16 %v1035
          %v1249 = vunpack.c.h.b16 %v1035
          %v1250 = vunpack.c.l.b16 %v1036
          %v1251 = vunpack.c.h.b16 %v1036
          %v1252 = vunpack.c.l.b16 %v1037
          %v1253 = vunpack.c.h.b16 %v1037
          %v1254 = vunpack.c.l.b16 %v1038
          %v1255 = vunpack.c.h.b16 %v1038
          %v1256 = vunpack.c.l.b16 %v1039
          %v1257 = vunpack.c.h.b16 %v1039
          %v1258 = vpack.c.b16 %v1132, %v1130
          %v1259 = vpack.c.b16 %v1133, %v1131
          %v1260 = vpack.c.b16 %v1136, %v1134
          %v1261 = vpack.c.b16 %v1137, %v1135
          %v1262 = vpack.c.b16 %v1140, %v1138
          %v1263 = vpack.c.b16 %v1141, %v1139
          %v1264 = vpack.c.b16 %v1144, %v1142
          %v1265 = vpack.c.b16 %v1145, %v1143
          %v1266 = vpack.c.b16 %v1148, %v1146
          %v1267 = vpack.c.b16 %v1149, %v1147
          %v1268 = vpack.c.b16 %v1152, %v1150
          %v1269 = vpack.c.b16 %v1153, %v1151
          %v1270 = vpack.c.b16 %v1156, %v1154
          %v1271 = vpack.c.b16 %v1157, %v1155
          %v1272 = vpack.c.b16 %v1160, %v1158
          %v1273 = vpack.c.b16 %v1161, %v1159
          %v1274 = vpack.c.b16 %v1164, %v1162
          %v1275 = vpack.c.b16 %v1165, %v1163
          %v1276 = vpack.c.b16 %v1168, %v1166
          %v1277 = vpack.c.b16 %v1169, %v1167
          %v1278 = vpack.c.b16 %v1172, %v1170
          %v1279 = vpack.c.b16 %v1173, %v1171
          %v1280 = vpack.c.b16 %v1176, %v1174
          %v1281 = vpack.c.b16 %v1177, %v1175
          %v1282 = vpack.c.b16 %v1180, %v1178
          %v1283 = vpack.c.b16 %v1181, %v1179
          %v1284 = vpack.c.b16 %v1184, %v1182
          %v1285 = vpack.c.b16 %v1185, %v1183
          %v1286 = vpack.c.b16 %v1188, %v1186
          %v1287 = vpack.c.b16 %v1189, %v1187
          %v1288 = vpack.c.b16 %v1192, %v1190
          %v1289 = vpack.c.b16 %v1193, %v1191
          %v1290 = vpack.c.b16 %v1196, %v1194
          %v1291 = vpack.c.b16 %v1197, %v1195
          %v1292 = vpack.c.b16 %v1200, %v1198
          %v1293 = vpack.c.b16 %v1201, %v1199
          %v1294 = vpack.c.b16 %v1204, %v1202
          %v1295 = vpack.c.b16 %v1205, %v1203
          %v1296 = vpack.c.b16 %v1208, %v1206
          %v1297 = vpack.c.b16 %v1209, %v1207
          %v1298 = vpack.c.b16 %v1212, %v1210
          %v1299 = vpack.c.b16 %v1213, %v1211
          %v1300 = vpack.c.b16 %v1216, %v1214
          %v1301 = vpack.c.b16 %v1217, %v1215
          %v1302 = vpack.c.b16 %v1220, %v1218
          %v1303 = vpack.c.b16 %v1221, %v1219
          %v1304 = vpack.c.b16 %v1224, %v1222
          %v1305 = vpack.c.b16 %v1225, %v1223
          %v1306 = vpack.c.b16 %v1228, %v1226
          %v1307 = vpack.c.b16 %v1229, %v1227
          %v1308 = vpack.c.b16 %v1232, %v1230
          %v1309 = vpack.c.b16 %v1233, %v1231
          %v1310 = vpack.c.b16 %v1236, %v1234
          %v1311 = vpack.c.b16 %v1237, %v1235
          %v1312 = vpack.c.b16 %v1240, %v1238
          %v1313 = vpack.c.b16 %v1241, %v1239
          %v1314 = vpack.c.b16 %v1244, %v1242
          %v1315 = vpack.c.b16 %v1245, %v1243
          %v1316 = vpack.c.b16 %v1248, %v1246
          %v1317 = vpack.c.b16 %v1249, %v1247
          %v1318 = vpack.c.b16 %v1252, %v1250
          %v1319 = vpack.c.b16 %v1253, %v1251
          %v1320 = vpack.c.b16 %v1256, %v1254
          %v1321 = vpack.c.b16 %v1257, %v1255
          %1386 = vmatprep.subr.bf16.mxu0 %v1259
          %1387 = vmatpush1.bf16.msra.mxu0 %v1258
          %1388 = vmatprep.subr.bf16.mxu0 %v1261
          %1389 = vmatpush1.bf16.msra.mxu0 %v1260
          %1390 = vmatprep.subr.bf16.mxu0 %v1263
          %1391 = vmatpush1.bf16.msra.mxu0 %v1262
          %1392 = vmatprep.subr.bf16.mxu0 %v1265
          %1393 = vmatpush1.bf16.msra.mxu0 %v1264
          %1394 = vmatprep.subr.bf16.mxu0 %v1267
          %1395 = vmatpush1.bf16.msra.mxu0 %v1266
          %1396 = vmatprep.subr.bf16.mxu0 %v1269
          %1397 = vmatpush1.bf16.msra.mxu0 %v1268
          %1398 = vmatprep.subr.bf16.mxu0 %v1271
          %1399 = vmatpush1.bf16.msra.mxu0 %v1270
          %1400 = vmatprep.subr.bf16.mxu0 %v1273
          %1401 = vmatpush1.bf16.msra.mxu0 %v1272
          %1402 = vmatprep.subr.bf16.mxu0 %v1275
          %1403 = vmatpush1.bf16.msra.mxu0 %v1274
          %1404 = vmatprep.subr.bf16.mxu0 %v1277
          %1405 = vmatpush1.bf16.msra.mxu0 %v1276
          %1406 = vmatprep.subr.bf16.mxu0 %v1279
          %1407 = vmatpush1.bf16.msra.mxu0 %v1278
          %1408 = vmatprep.subr.bf16.mxu0 %v1281
          %1409 = vmatpush1.bf16.msra.mxu0 %v1280
          %1410 = vmatprep.subr.bf16.mxu0 %v1283
          %1411 = vmatpush1.bf16.msra.mxu0 %v1282
          %1412 = vmatprep.subr.bf16.mxu0 %v1285
          %1413 = vmatpush1.bf16.msra.mxu0 %v1284
          %1414 = vmatprep.subr.bf16.mxu0 %v1287
          %1415 = vmatpush1.bf16.msra.mxu0 %v1286
          %1416 = vmatprep.subr.bf16.mxu0 %v1289
          %1417 = vmatpush1.bf16.msra.mxu0 %v1288
          %1418 = vmatprep.mubr.bf16.mxu0 %v1059
          %1419 = vmatmul.mubr.bf16.gmra.mrb[0].mxu0 %v1058
          %v1420 = vpop.f32.mrb[0].mxu0
          %v1421 = vadd.f32 %v1045, %v1420
          %v1422 = vpop.f32.mrb[0].mxu0
          %v1423 = vadd.f32 %v1049, %v1422
          %v1424 = vpop.f32.mrb[0].mxu0
          %v1425 = vpop.f32.mrb[0].mxu0
          %1426 = vdwg.mxu0
          %1427 = vmatprep.subr.bf16.mxu0 %v1291
          %1428 = vmatpush1.bf16.msra.mxu0 %v1290
          %1429 = vmatprep.subr.bf16.mxu0 %v1293
          %1430 = vmatpush1.bf16.msra.mxu0 %v1292
          %1431 = vmatprep.subr.bf16.mxu0 %v1295
          %1432 = vmatpush1.bf16.msra.mxu0 %v1294
          %1433 = vmatprep.subr.bf16.mxu0 %v1297
          %1434 = vmatpush1.bf16.msra.mxu0 %v1296
          %1435 = vmatprep.subr.bf16.mxu0 %v1299
          %1436 = vmatpush1.bf16.msra.mxu0 %v1298
          %1437 = vmatprep.subr.bf16.mxu0 %v1301
          %1438 = vmatpush1.bf16.msra.mxu0 %v1300
          %1439 = vmatprep.subr.bf16.mxu0 %v1303
          %1440 = vmatpush1.bf16.msra.mxu0 %v1302
          %1441 = vmatprep.subr.bf16.mxu0 %v1305
          %1442 = vmatpush1.bf16.msra.mxu0 %v1304
          %1443 = vmatprep.subr.bf16.mxu0 %v1307
          %1444 = vmatpush1.bf16.msra.mxu0 %v1306
          %1445 = vmatprep.subr.bf16.mxu0 %v1309
          %1446 = vmatpush1.bf16.msra.mxu0 %v1308
          %1447 = vmatprep.subr.bf16.mxu0 %v1311
          %1448 = vmatpush1.bf16.msra.mxu0 %v1310
          %1449 = vmatprep.subr.bf16.mxu0 %v1313
          %1450 = vmatpush1.bf16.msra.mxu0 %v1312
          %1451 = vmatprep.subr.bf16.mxu0 %v1315
          %1452 = vmatpush1.bf16.msra.mxu0 %v1314
          %1453 = vmatprep.subr.bf16.mxu0 %v1317
          %1454 = vmatpush1.bf16.msra.mxu0 %v1316
          %1455 = vmatprep.subr.bf16.mxu0 %v1319
          %1456 = vmatpush1.bf16.msra.mxu0 %v1318
          %1457 = vmatprep.subr.bf16.mxu0 %v1321
          %1458 = vmatpush1.bf16.msra.mxu0 %v1320
          %1459 = vmatprep.mubr.bf16.mxu0 %v1061
          %1460 = vmatmul.mubr.bf16.gmra.mrb[0].mxu0 %v1060
          %v1461 = vpop.f32.mrb[0].mxu0
          %v1462 = vadd.f32 %v1421, %v1461
          %v1463 = vpop.f32.mrb[0].mxu0
          %v1464 = vadd.f32 %v1423, %v1463
          %v1465 = vpop.f32.mrb[0].mxu0
          %v1466 = vpop.f32.mrb[0].mxu0
          %1467 = vdwg.mxu0
          %1468 = vst [vmem:[%s345] sm:$0xff] %v1462
          %1469 = vst [vmem:[%s345 + $0x8] sm:$0xff] %v1464
        $region56: #{autorec_forward.1} parent=39 // pred_fallthru
          _
        %s1470 = sand.u32 %s194, 1
        %s1471 = scalar_lea.sflag [#allocation5], %s1470
        %s1472 = sand.u32 %s194, 1
        %s1473 = smul.addr %s1472, 16
        %s1474 = scalar_lea.vmem [#allocation4], %s1473
        // Predicated region
        $region57: #{autorec_forward.1} parent=39 // pred_check
          %p1475 = pneg %p204
        $region58: #{autorec_forward.1} parent=39 // pred_check_branch
          %1477 = sbr.rel (%p1475) target = $region60
        $region59: #{autorec_forward.1} parent=39 // pred_region
          %s1478 = ssub.s32 %s24, 1
          %p1479 = scmp.gt.s32.totalorder %s1478, 0
          %s1480 = scalar_select %p1479, %s1478, 0
          %s1481 = smul.u32 2, %s1480
          %s1483 = ssub.s32 256, 256
          %1484 = vsyncadd %s1471, %s1483
          %s1485 = smul.addr %s23, 2
          %s1486 = sadd.s32 %s1481, %s1485
          %s1487 = smul.addr %s1486, 128
          %s1488 = scalar_lea.hbm %s5, %s1487
          %s1490 = sshll.u32 %s1474, 4
          %s1491 = int_to_ptr.vmem [resolvable:$true] %s1490
          %1493 = dma.vmem_to_hbm [thread:$0]  %s1491, 256, %s1488, %s1471
        $region60: #{autorec_forward.1} parent=39 // pred_fallthru
          _
      $region40: #{autorec_forward.1} parent=5 // pred_fallthru
        _
      %p1494 = scmp.le.s32.totalorder 2, %s14
      // Predicated region
      $region61: #{autorec_forward.1} parent=5 // pred_check
        %p1495 = pneg %p1494
      $region62: #{autorec_forward.1} parent=5 // pred_check_branch
        %1497 = sbr.rel (%p1495) target = $region64
      $region63: #{autorec_forward.1} parent=5 // pred_region
        %s1498 = ssub.s32 %s14, 2
        // Predicated region
        $region65: #{autorec_forward.1} parent=63 // pred_check
          %p1499 = pneg %p210
        $region66: #{autorec_forward.1} parent=63 // pred_check_branch
          %1501 = sbr.rel (%p1499) target = $region68
        $region67: #{autorec_forward.1} parent=63 // pred_region
          %s1502 = sand.u32 %s195, 1
          %s1503 = scalar_lea.sflag [#allocation5], %s1502
          %s1504 = sand.u32 %s195, 1
          %s1505 = smul.addr %s1504, 16
          %s1506 = scalar_lea.vmem [#allocation4], %s1505
          %1507 = dma.done %s1503, 256
        $region68: #{autorec_forward.1} parent=63 // pred_fallthru
          _
      $region64: #{autorec_forward.1} parent=5 // pred_fallthru
        _
    $region6: #{autorec_forward.1} parent=1 // loop_footer
      %s18 = sadd.s32 1, %s14
    $region7: #{autorec_forward.1} parent=1 // loop_footer_branch
      %13 = sbr.rel target = $region3
    $region8: #{autorec_forward.1} parent=1 // loop_exit
      _
    %1508 = vsyncpa [#allocation5], 1
    %s1509 = scalar_lea.sflag [#allocation5], 1
    %1510 = vsyncpa %s1509, 1

</llo_original>
